<compile_context>
chip_gen: v7x
topology: tpu7x:2x2x1
jax: 0.10.0
libtpu: 0.0.40
codegen_flags: <defaults>
</compile_context>

<pallas_src>
import functools

import jax
import jax.numpy as jnp
from jax.experimental import pallas as pl
from jax.experimental.pallas import tpu as pltpu

EPS = 1e-5  # torch.nn.LayerNorm default


def _round_up(n, m):
    return ((n + m - 1) // m) * m


def _vmem_limit_bytes():
    """~3/4 of physical VMEM, capped at 100 MiB (v5e/v6e: 128 MiB -> 96 MiB,
    v7x: 64 MiB -> 48 MiB).  Falls back to the smallest generation."""
    try:
        cap = int(pltpu.get_tpu_info().vmem_capacity_bytes)
    except Exception:
        cap = 64 * 1024 * 1024
    return min((cap * 3) // 4, 100 * 1024 * 1024)


_COMPILER_PARAMS = pltpu.CompilerParams(
    dimension_semantics=("parallel",),      # row axis is embarrassingly parallel
    vmem_limit_bytes=_vmem_limit_bytes(),
)


def _pick_block_r(R, requested, itemsize):
    """Row-tile size: as large as requested, but keep >= ~8 grid steps so the
    BlockSpec pipeline double-buffers and v7x's two TensorCores each get several
    steps.  Sublane alignment: 8 rows for 4-byte dtypes, 16 for 2-byte."""
    align = 16 if itemsize < 4 else 8
    target = max(align, _round_up(pl.cdiv(R, 8), align))
    return max(align, min(_round_up(requested, align), target))


def _normalize_f32(x):
    """Zero-mean / unit-variance over the last axis in f32 (no affine).
    One-pass mean and E[x^2]: the two cross-lane reductions are independent."""
    x = x.astype(jnp.float32)
    mean = jnp.mean(x, axis=-1, keepdims=True)
    mean_sq = jnp.mean(x * x, axis=-1, keepdims=True)
    var = jnp.maximum(mean_sq - mean * mean, 0.0)
    return (x - mean) * jax.lax.rsqrt(var + EPS)


# --------------------------- fused PreNorm + fn kernel ----------------------------

def _mix_kernel(x_ref, c_ref, wx_ref, wc_ref, b_ref, o_ref, *, normalize):
    # x_ref: (block_r, D)   c_ref: (block_r, C)
    # wx_ref: (D, Dout)  wc_ref: (C, Dout)  b_ref: (1, Dout)  o_ref: (block_r, Dout)
    x = x_ref[...]
    c = c_ref[...]
    if normalize:
        x = _normalize_f32(x)   # LN affine already folded into wx/wc/bias
        c = _normalize_f32(c)
    acc = jnp.dot(x.astype(wx_ref.dtype), wx_ref[...],
                  preferred_element_type=jnp.float32)
    acc = acc + jnp.dot(c.astype(wc_ref.dtype), wc_ref[...],
                        preferred_element_type=jnp.float32)
    o_ref[...] = (acc + b_ref[...].astype(jnp.float32)).astype(o_ref.dtype)


def _row_tiled_mix(x2d, c2d, wx, wc, bias, *, normalize, out_dtype, block_r=1024):
    R, D = x2d.shape
    Rc, C = c2d.shape
    assert R == Rc
    Dout = wx.shape[1]
    itemsize = min(jnp.dtype(x2d.dtype).itemsize, jnp.dtype(c2d.dtype).itemsize)
    br = _pick_block_r(R, block_r, itemsize)
    grid = (pl.cdiv(R, br),)   # partial tail block handled by Pallas (masked writes)
    kernel = functools.partial(_mix_kernel, normalize=normalize)
    return pl.pallas_call(
        kernel,
        out_shape=jax.ShapeDtypeStruct((R, Dout), out_dtype),
        grid_spec=pl.GridSpec(
            grid=grid,
            in_specs=[
                pl.BlockSpec((br, D), lambda i: (i, 0)),      # x rows (pipelined)
                pl.BlockSpec((br, C), lambda i: (i, 0)),      # ctx rows (pipelined)
                pl.BlockSpec((D, Dout), lambda i: (0, 0)),    # resident weights
                pl.BlockSpec((C, Dout), lambda i: (0, 0)),
                pl.BlockSpec((1, Dout), lambda i: (0, 0)),    # folded bias
            ],
            out_specs=pl.BlockSpec((br, Dout), lambda i: (i, 0)),
        ),
        compiler_params=_COMPILER_PARAMS,
    )(x2d, c2d, wx, wc, bias.reshape(1, Dout))


def fused_prenorm_linear_mix(x, context, norm_g, norm_b, norm_ctx_g, norm_ctx_b,
                             wx, bx, wc, bc, *, block_r=1024):
    """LN(x) @ Wx + bx + LN(ctx) @ Wc + bc in one pallas_call.

    LayerNorm affines folded into weights/bias once per call (exact algebra):
        Wx' = g_x[:,None] * Wx,  Wc' = g_c[:,None] * Wc,
        bias' = bx + bc + b_x @ Wx + b_c @ Wc
    so the kernel only normalizes."""
    B, N, D = x.shape
    Bc, M, C = context.shape
    assert B == Bc and M == N, "LinearMixFn requires matching batch / seq"
    Dout = wx.shape[1]
    R = B * N

    wx_f = wx.astype(jnp.float32)
    wc_f = wc.astype(jnp.float32)
    wx_p = (norm_g.astype(jnp.float32)[:, None] * wx_f).astype(wx.dtype)
    wc_p = (norm_ctx_g.astype(jnp.float32)[:, None] * wc_f).astype(wc.dtype)
    bias = (bx.astype(jnp.float32) + bc.astype(jnp.float32)
            + norm_b.astype(jnp.float32) @ wx_f
            + norm_ctx_b.astype(jnp.float32) @ wc_f)

    out = _row_tiled_mix(x.reshape(R, D), context.reshape(R, C),
                         wx_p, wc_p, bias,
                         normalize=True, out_dtype=x.dtype, block_r=block_r)
    return out.reshape(B, N, Dout)


# ----------------- standalone row-tiled LayerNorm (generic fallback) --------------

def _layernorm_kernel(x_ref, g_ref, b_ref, o_ref):
    y = (_normalize_f32(x_ref[...]) * g_ref[...].astype(jnp.float32)
         + b_ref[...].astype(jnp.float32))
    o_ref[...] = y.astype(o_ref.dtype)


def pallas_layernorm(x2d, gamma, beta, *, block_r=1024):
    R, D = x2d.shape
    br = _pick_block_r(R, block_r, jnp.dtype(x2d.dtype).itemsize)
    return pl.pallas_call(
        _layernorm_kernel,
        out_shape=jax.ShapeDtypeStruct((R, D), x2d.dtype),
        grid_spec=pl.GridSpec(
            grid=(pl.cdiv(R, br),),
            in_specs=[pl.BlockSpec((br, D), lambda i: (i, 0)),
                      pl.BlockSpec((1, D), lambda i: (0, 0)),
                      pl.BlockSpec((1, D), lambda i: (0, 0))],
            out_specs=pl.BlockSpec((br, D), lambda i: (i, 0)),
        ),
        compiler_params=_COMPILER_PARAMS,
    )(x2d, gamma.reshape(1, D), beta.reshape(1, D))


# ------------------------------------ PreNorm -------------------------------------

class LinearMixFn:
    """fn(x, context) = x @ Wx + bx + context @ Wc + bc   (M == N)."""

    def __init__(self, dim, context_dim, key, dtype=jnp.float32):
        k1, k2, k3, k4 = jax.random.split(key, 4)
        self.wx = (0.05 * jax.random.normal(k1, (dim, dim), jnp.float32)).astype(dtype)
        self.bx = (0.05 * jax.random.normal(k2, (dim,), jnp.float32)).astype(dtype)
        self.wc = (0.05 * jax.random.normal(k3, (context_dim, dim), jnp.float32)).astype(dtype)
        self.bc = (0.05 * jax.random.normal(k4, (dim,), jnp.float32)).astype(dtype)

    def __call__(self, x, context):
        # Fused fallback: both matmuls, bias add and yx+yc sum in ONE pallas_call
        # (no yx / yc HBM round trips, no separate XLA add).
        B, N, D = x.shape
        _, M, C = context.shape
        bias = self.bx.astype(jnp.float32) + self.bc.astype(jnp.float32)
        out = _row_tiled_mix(x.reshape(B * N, D), context.reshape(B * M, C),
                             self.wx, self.wc, bias,
                             normalize=False, out_dtype=x.dtype)
        return out.reshape(B, N, -1)


class PreNorm:
    """JAX/Pallas port of perceiver_pytorch PreNorm (fused fast path for LinearMixFn)."""

    def __init__(self, dim, fn, context_dim=None, key=None):
        if key is None:
            key = jax.random.PRNGKey(0)
        k1, k2, k3, k4 = jax.random.split(key, 4)
        self.fn = fn
        # nn.LayerNorm(dim) params (random affine so the affine path is exercised).
        self.norm_g = 1.0 + 0.1 * jax.random.normal(k1, (dim,), jnp.float32)
        self.norm_b = 0.1 * jax.random.normal(k2, (dim,), jnp.float32)
        if context_dim is not None:
            self.norm_ctx_g = 1.0 + 0.1 * jax.random.normal(k3, (context_dim,), jnp.float32)
            self.norm_ctx_b = 0.1 * jax.random.normal(k4, (context_dim,), jnp.float32)
        else:
            self.norm_ctx_g = None
            self.norm_ctx_b = None

    def __call__(self, x, **kwargs):
        # Fused fast path: LN(x) @ Wx + LN(ctx) @ Wc + bias in one pallas_call.
        if (self.norm_ctx_g is not None and isinstance(self.fn, LinearMixFn)
                and "context" in kwargs):
            ctx = kwargs["context"]
            return fused_prenorm_linear_mix(
                x, ctx,
                self.norm_g, self.norm_b, self.norm_ctx_g, self.norm_ctx_b,
                self.fn.wx, self.fn.bx, self.fn.wc, self.fn.bc)

        # Generic fallback: row-tiled LN kernels, then call fn.
        # TODO(synk): arbitrary injected `fn` sub-modules cannot be fused generically.
        B, N, D = x.shape
        xn = pallas_layernorm(x.reshape(B * N, D), self.norm_g, self.norm_b).reshape(B, N, D)
        if self.norm_ctx_g is not None and "context" in kwargs:
            ctx = kwargs["context"]
            Bc, M, C = ctx.shape
            ctxn = pallas_layernorm(ctx.reshape(Bc * M, C),
                                    self.norm_ctx_g, self.norm_ctx_b).reshape(Bc, M, C)
            kwargs = dict(kwargs, context=ctxn)
        return self.fn(xn, **kwargs)


# ------------------------------------ reference ------------------------------------

def _ref_layernorm(x, g, b):
    x = x.astype(jnp.float32)
    mean = jnp.mean(x, axis=-1, keepdims=True)
    var = jnp.mean((x - mean) ** 2, axis=-1, keepdims=True)
    return (x - mean) * jax.lax.rsqrt(var + EPS) * g + b


def _ref_prenorm(pn, fn, x, context):
    xn = _ref_layernorm(x, pn.norm_g, pn.norm_b)
    cn = _ref_layernorm(context, pn.norm_ctx_g, pn.norm_ctx_b)
    yx = jnp.einsum("bnd,de->bne", xn, fn.wx.astype(jnp.float32)) + fn.bx.astype(jnp.float32)
    yc = jnp.einsum("bmc,ce->bme", cn, fn.wc.astype(jnp.float32)) + fn.bc.astype(jnp.float32)
    return yx + yc


# -------------------------------------- main ---------------------------------------

if __name__ == "__main__":
    key = jax.random.PRNGKey(0)
    kx, kc, kp, kf = jax.random.split(key, 4)

    # Small but layout-friendly shapes: D = 128 (lane-dense output), C = 64,
    # R = B*N = 512 rows -> row tile 64 -> grid of 8 parallel steps.
    B, N, D = 2, 256, 128       # x: (batch, seq, dim)
    M, C = 256, 64              # context: (batch, seq, context_dim), M == N

    x = jax.random.normal(kx, (B, N, D), jnp.float32)
    context = jax.random.normal(kc, (B, M, C), jnp.float32)

    # --- f32 run (tight tolerance vs. f32 reference) ---
    fn = LinearMixFn(D, C, kf)
    prenorm = PreNorm(D, fn, context_dim=C, key=kp)
    out = jax.block_until_ready(prenorm(x, context=context))
    ref = _ref_prenorm(prenorm, fn, x, context)
    assert out.shape == (B, N, D)
    assert jnp.allclose(out, ref, atol=1e-4, rtol=1e-4), "f32 mismatch vs reference"

    # --- bf16 activations/weights in HBM (main bandwidth lever); LN math and
    #     MXU accumulation stay f32 inside the kernel ---
    fn16 = LinearMixFn(D, C, kf, dtype=jnp.bfloat16)
    prenorm16 = PreNorm(D, fn16, context_dim=C, key=kp)
    x16 = x.astype(jnp.bfloat16)
    c16 = context.astype(jnp.bfloat16)
    out16 = jax.block_until_ready(prenorm16(x16, context=c16))
    ref16 = _ref_prenorm(prenorm16, fn16,
                         x16.astype(jnp.float32), c16.astype(jnp.float32))
    assert out16.shape == (B, N, D) and out16.dtype == jnp.bfloat16
    assert jnp.allclose(out16.astype(jnp.float32), ref16, atol=5e-2, rtol=5e-2), \
        "bf16 mismatch vs reference"

    print("KERNEL_OK")
</pallas_src>

<mosaic_0001>
module attributes {stable_mosaic.version = 11 : i64} {
  func.func @_mix_kernel(%arg0: i32, %arg1: memref<64x128xf32, #tpu.memory_space<vmem>>, %arg2: memref<64x64xf32, #tpu.memory_space<vmem>>, %arg3: memref<128x128xf32, #tpu.memory_space<vmem>>, %arg4: memref<64x128xf32, #tpu.memory_space<vmem>>, %arg5: memref<1x128xf32, #tpu.memory_space<vmem>>, %arg6: memref<64x128xf32, #tpu.memory_space<vmem>>) attributes {dimension_semantics = [#tpu.dimension_semantics<parallel>], iteration_bounds = array<i64: 8>, scalar_prefetch = 0 : i64, scratch_operands = 0 : i64, tpu.core_type = #tpu.core_type<tc>, window_params = [{transform_indices = @transform_0, window_bounds = array<i64: 64, 128>}, {transform_indices = @transform_1, window_bounds = array<i64: 64, 64>}, {pipeline_mode = #tpu.pipeline_mode<synchronous>, transform_indices = @transform_2, window_bounds = array<i64: 128, 128>}, {pipeline_mode = #tpu.pipeline_mode<synchronous>, transform_indices = @transform_3, window_bounds = array<i64: 64, 128>}, {pipeline_mode = #tpu.pipeline_mode<synchronous>, transform_indices = @transform_4, window_bounds = array<i64: 1, 128>}, {transform_indices = @transform_5, window_bounds = array<i64: 64, 128>}]} {
    %c0 = arith.constant 0 : index
    %c0_0 = arith.constant 0 : index
    %0 = vector.load %arg1[%c0, %c0_0] : memref<64x128xf32, #tpu.memory_space<vmem>>, vector<64x128xf32>
    %c0_1 = arith.constant 0 : index
    %c0_2 = arith.constant 0 : index
    %1 = vector.load %arg2[%c0_1, %c0_2] : memref<64x64xf32, #tpu.memory_space<vmem>>, vector<64x64xf32>
    %cst = arith.constant dense<0.000000e+00> : vector<64xf32>
    %2 = vector.multi_reduction <add>, %0, %cst [1] : vector<64x128xf32> to vector<64xf32>
    %3 = vector.shape_cast %2 : vector<64xf32> to vector<64x1xf32>
    %cst_3 = arith.constant 1.280000e+02 : f32
    %4 = vector.broadcast %cst_3 : f32 to vector<64x1xf32>
    %5 = arith.divf %3, %4 : vector<64x1xf32>
    %6 = arith.mulf %0, %0 : vector<64x128xf32>
    %cst_4 = arith.constant dense<0.000000e+00> : vector<64xf32>
    %7 = vector.multi_reduction <add>, %6, %cst_4 [1] : vector<64x128xf32> to vector<64xf32>
    %8 = vector.shape_cast %7 : vector<64xf32> to vector<64x1xf32>
    %cst_5 = arith.constant 1.280000e+02 : f32
    %9 = vector.broadcast %cst_5 : f32 to vector<64x1xf32>
    %10 = arith.divf %8, %9 : vector<64x1xf32>
    %11 = arith.mulf %5, %5 : vector<64x1xf32>
    %12 = arith.subf %10, %11 : vector<64x1xf32>
    %cst_6 = arith.constant 0.000000e+00 : f32
    %13 = vector.broadcast %cst_6 : f32 to vector<64x1xf32>
    %14 = arith.maximumf %12, %13 : vector<64x1xf32>
    %15 = vector.broadcast %5 : vector<64x1xf32> to vector<64x128xf32>
    %16 = arith.subf %0, %15 : vector<64x128xf32>
    %cst_7 = arith.constant 9.99999974E-6 : f32
    %17 = vector.broadcast %cst_7 : f32 to vector<64x1xf32>
    %18 = arith.addf %14, %17 : vector<64x1xf32>
    %19 = math.rsqrt %18 : vector<64x1xf32>
    %20 = vector.broadcast %19 : vector<64x1xf32> to vector<64x128xf32>
    %21 = arith.mulf %16, %20 : vector<64x128xf32>
    %cst_8 = arith.constant dense<0.000000e+00> : vector<64xf32>
    %22 = vector.multi_reduction <add>, %1, %cst_8 [1] : vector<64x64xf32> to vector<64xf32>
    %23 = vector.shape_cast %22 : vector<64xf32> to vector<64x1xf32>
    %cst_9 = arith.constant 6.400000e+01 : f32
    %24 = vector.broadcast %cst_9 : f32 to vector<64x1xf32>
    %25 = arith.divf %23, %24 : vector<64x1xf32>
    %26 = arith.mulf %1, %1 : vector<64x64xf32>
    %cst_10 = arith.constant dense<0.000000e+00> : vector<64xf32>
    %27 = vector.multi_reduction <add>, %26, %cst_10 [1] : vector<64x64xf32> to vector<64xf32>
    %28 = vector.shape_cast %27 : vector<64xf32> to vector<64x1xf32>
    %cst_11 = arith.constant 6.400000e+01 : f32
    %29 = vector.broadcast %cst_11 : f32 to vector<64x1xf32>
    %30 = arith.divf %28, %29 : vector<64x1xf32>
    %31 = arith.mulf %25, %25 : vector<64x1xf32>
    %32 = arith.subf %30, %31 : vector<64x1xf32>
    %cst_12 = arith.constant 0.000000e+00 : f32
    %33 = vector.broadcast %cst_12 : f32 to vector<64x1xf32>
    %34 = arith.maximumf %32, %33 : vector<64x1xf32>
    %35 = vector.broadcast %25 : vector<64x1xf32> to vector<64x64xf32>
    %36 = arith.subf %1, %35 : vector<64x64xf32>
    %cst_13 = arith.constant 9.99999974E-6 : f32
    %37 = vector.broadcast %cst_13 : f32 to vector<64x1xf32>
    %38 = arith.addf %34, %37 : vector<64x1xf32>
    %39 = math.rsqrt %38 : vector<64x1xf32>
    %40 = vector.broadcast %39 : vector<64x1xf32> to vector<64x64xf32>
    %41 = arith.mulf %36, %40 : vector<64x64xf32>
    %c0_14 = arith.constant 0 : index
    %c0_15 = arith.constant 0 : index
    %42 = vector.load %arg3[%c0_14, %c0_15] : memref<128x128xf32, #tpu.memory_space<vmem>>, vector<128x128xf32>
    %cst_16 = arith.constant dense<0.000000e+00> : vector<64x128xf32>
    %43 = tpu.matmul %21, %42, %cst_16 {dimension_numbers = #tpu.dot_dimension_numbers<[1], [0], [0], [1], [0, 0, 1, 1], [], []>} : vector<64x128xf32>, vector<128x128xf32>, vector<64x128xf32> -> vector<64x128xf32>
    %c0_17 = arith.constant 0 : index
    %c0_18 = arith.constant 0 : index
    %44 = vector.load %arg4[%c0_17, %c0_18] : memref<64x128xf32, #tpu.memory_space<vmem>>, vector<64x128xf32>
    %cst_19 = arith.constant dense<0.000000e+00> : vector<64x128xf32>
    %45 = tpu.matmul %41, %44, %cst_19 {dimension_numbers = #tpu.dot_dimension_numbers<[1], [0], [0], [1], [0, 0, 1, 1], [], []>} : vector<64x64xf32>, vector<64x128xf32>, vector<64x128xf32> -> vector<64x128xf32>
    %46 = arith.addf %43, %45 : vector<64x128xf32>
    %c0_20 = arith.constant 0 : index
    %c0_21 = arith.constant 0 : index
    %47 = vector.load %arg5[%c0_20, %c0_21] : memref<1x128xf32, #tpu.memory_space<vmem>>, vector<1x128xf32>
    %48 = vector.broadcast %47 : vector<1x128xf32> to vector<64x128xf32>
    %49 = arith.addf %46, %48 : vector<64x128xf32>
    %c0_22 = arith.constant 0 : index
    %c0_23 = arith.constant 0 : index
    %50 = vector.load %arg6[%c0_22, %c0_23] : memref<64x128xf32, #tpu.memory_space<vmem>>, vector<64x128xf32>
    tpu.vector_store %arg6[%c0_22, %c0_23], %49 {strides = array<i32>} : memref<64x128xf32, #tpu.memory_space<vmem>>, vector<64x128xf32>,
    return
  }
  func.func @transform_0(%arg0: i32) -> (i32, i32) {
    %c0_i32 = arith.constant 0 : i32
    %c0_i32_0 = arith.constant 0 : i32
    return %arg0, %c0_i32 : i32, i32
  }
  func.func @transform_1(%arg0: i32) -> (i32, i32) {
    %c0_i32 = arith.constant 0 : i32
    %c0_i32_0 = arith.constant 0 : i32
    return %arg0, %c0_i32 : i32, i32
  }
  func.func @transform_2(%arg0: i32) -> (i32, i32) {
    %c0_i32 = arith.constant 0 : i32
    %c0_i32_0 = arith.constant 0 : i32
    %c0_i32_1 = arith.constant 0 : i32
    return %c0_i32, %c0_i32_0 : i32, i32
  }
  func.func @transform_3(%arg0: i32) -> (i32, i32) {
    %c0_i32 = arith.constant 0 : i32
    %c0_i32_0 = arith.constant 0 : i32
    %c0_i32_1 = arith.constant 0 : i32
    return %c0_i32, %c0_i32_0 : i32, i32
  }
  func.func @transform_4(%arg0: i32) -> (i32, i32) {
    %c0_i32 = arith.constant 0 : i32
    %c0_i32_0 = arith.constant 0 : i32
    %c0_i32_1 = arith.constant 0 : i32
    return %c0_i32, %c0_i32_0 : i32, i32
  }
  func.func @transform_5(%arg0: i32) -> (i32, i32) {
    %c0_i32 = arith.constant 0 : i32
    %c0_i32_0 = arith.constant 0 : i32
    return %arg0, %c0_i32 : i32, i32
  }
}

</mosaic_0001>

<llo_original>
// kernel: tpu_custom_call.1
$region0: #{tpu_custom_call.1}
  #allocation0 [shape = 'u32[]', space=smem, size = 0x4, offset = 0x4, fixed_abs, tag = 'smem constant byte address 0x4 - core index']
  #allocation1 [shape = 'u32[144,128]{1,0:T(1,128)}', space=vmem, size = 0x12000, scoped, tag = 'internal scratch']
  %s0 = inlined_call_operand.vmem [shape: f32[512,128], index: 0, kind: input, shape index: {}]
  %s1 = inlined_call_operand.vmem [shape: f32[512,64], index: 1, kind: input, shape index: {}]
  %s2 = inlined_call_operand.vmem [shape: f32[128,128], index: 2, kind: input, shape index: {}]
  %s3 = inlined_call_operand.vmem [shape: f32[64,128], index: 3, kind: input, shape index: {}]
  %s4 = inlined_call_operand.vmem [shape: f32[1,128], index: 4, kind: input, shape index: {}]
  %s5 = inlined_call_operand.hbm [shape: f32[512,128], index: 5, kind: output, shape index: {}]
  %s6 = sld [smem:[#allocation0]]
  $region53: #{tpu_custom_call.1} parent=0
    _
  %s8 = ssub.s32 1, %s6
  %s9 = scalar_select 0, %s8, %s6
  $region1: #{tpu_custom_call.1} parent=0
    #allocation2 [shape = 'u8[65536]{0}', space=vmem, size = 0x10000, scoped, tag = 'output window, operand 0']
    #allocation3 [shape = 's32[2]{0}', space=sflag, size = 0x8, scoped, tag = 'scoped memory for tpu_custom_call.1']
    %10 = vsyncpa [#allocation3], 0
    %s11 = scalar_lea.sflag [#allocation3], 1
    %12 = vsyncpa %s11, 0
    loop: start=0, step=1, limit=10
    $region2: #{tpu_custom_call.1} parent=1 // loop_pre_header
      _
    $region3: #{tpu_custom_call.1} parent=1 // loop_header
      %s14 = sphi 0, %s18
      %p15 = scmp.ge.s32.totalorder %s14, 10
      %s24 = sphi 0, %s26
      %s27 = sphi 0, %s24
      %s28 = sphi 0, %s27
      %s44 = sphi 0, %s28
      %s50 = sphi 0, %s52
      %s53 = sphi 0, %s50
      %s54 = sphi 0, %s53
      %s70 = sphi 0, %s54
      %s74 = sphi 0, %s74
      %s76 = sphi 0, %s74
      %s77 = sphi 0, %s76
      %s91 = sphi 0, %s77
      %s95 = sphi 0, %s95
      %s97 = sphi 0, %s95
      %s98 = sphi 0, %s97
      %s112 = sphi 0, %s98
      %s116 = sphi 0, %s116
      %s118 = sphi 0, %s116
      %s119 = sphi 0, %s118
      %s133 = sphi 0, %s119
      %s139 = sphi 0, %s141
      %s142 = sphi 0, %s139
      %s143 = sphi 0, %s142
      %s159 = sphi 0, %s143
    $region4: #{tpu_custom_call.1} parent=1 // loop_header_branch
      %17 = sbr.rel (%p15) target = $region8
    $region5: #{tpu_custom_call.1} parent=1 // loop_body
      %s19 = ssub.s32 %s14, 1
      %s20 = ssub.s32 %s14, 2
      %s21 = sadd.s32 %s14, 1
      %s22 = ssub.s32 %s14, %s21
      %p23 = scmp.eq.s32.totalorder %s22, 0
      %s25 = sadd.s32 %s24, 1
      %s26 = scalar_select %p23, %s24, %s25
      %p29 = pneg %p23
      %p30 = scmp.eq.s32.totalorder %s14, 7
      %p31 = por %p29, %p30
      %p32 = scmp.ne.s32.totalorder %s24, %s27
      %p33 = scmp.eq.s32.totalorder %s14, 0
      %p34 = por %p32, %p33
      %p35 = scmp.ne.s32.totalorder %s24, %s27
      %p36 = scmp.eq.s32.totalorder %s19, 7
      %p37 = por %p35, %p36
      %p38 = scmp.ne.s32.totalorder %s27, %s28
      %p39 = scmp.eq.s32.totalorder %s19, 0
      %p40 = por %p38, %p39
      %p41 = scmp.ne.s32.totalorder %s27, %s28
      %p42 = scmp.eq.s32.totalorder %s20, 7
      %p43 = por %p41, %p42
      %p45 = scmp.ne.s32.totalorder %s28, %s44
      %p46 = scmp.eq.s32.totalorder %s20, 0
      %p47 = por %p45, %p46
      %s48 = ssub.s32 %s14, %s21
      %p49 = scmp.eq.s32.totalorder %s48, 0
      %s51 = sadd.s32 %s50, 1
      %s52 = scalar_select %p49, %s50, %s51
      %p55 = pneg %p49
      %p56 = scmp.eq.s32.totalorder %s14, 7
      %p57 = por %p55, %p56
      %p58 = scmp.ne.s32.totalorder %s50, %s53
      %p59 = scmp.eq.s32.totalorder %s14, 0
      %p60 = por %p58, %p59
      %p61 = scmp.ne.s32.totalorder %s50, %s53
      %p62 = scmp.eq.s32.totalorder %s19, 7
      %p63 = por %p61, %p62
      %p64 = scmp.ne.s32.totalorder %s53, %s54
      %p65 = scmp.eq.s32.totalorder %s19, 0
      %p66 = por %p64, %p65
      %p67 = scmp.ne.s32.totalorder %s53, %s54
      %p68 = scmp.eq.s32.totalorder %s20, 7
      %p69 = por %p67, %p68
      %p71 = scmp.ne.s32.totalorder %s54, %s70
      %p72 = scmp.eq.s32.totalorder %s20, 0
      %p73 = por %p71, %p72
      %s75 = sadd.s32 %s74, 1
      %p78 = scmp.eq.s32.totalorder %s14, 7
      %p79 = scmp.ne.s32.totalorder %s74, %s76
      %p80 = scmp.eq.s32.totalorder %s14, 0
      %p81 = por %p79, %p80
      %p82 = scmp.ne.s32.totalorder %s74, %s76
      %p83 = scmp.eq.s32.totalorder %s19, 7
      %p84 = por %p82, %p83
      %p85 = scmp.ne.s32.totalorder %s76, %s77
      %p86 = scmp.eq.s32.totalorder %s19, 0
      %p87 = por %p85, %p86
      %p88 = scmp.ne.s32.totalorder %s76, %s77
      %p89 = scmp.eq.s32.totalorder %s20, 7
      %p90 = por %p88, %p89
      %p92 = scmp.ne.s32.totalorder %s77, %s91
      %p93 = scmp.eq.s32.totalorder %s20, 0
      %p94 = por %p92, %p93
      %s96 = sadd.s32 %s95, 1
      %p99 = scmp.eq.s32.totalorder %s14, 7
      %p100 = scmp.ne.s32.totalorder %s95, %s97
      %p101 = scmp.eq.s32.totalorder %s14, 0
      %p102 = por %p100, %p101
      %p103 = scmp.ne.s32.totalorder %s95, %s97
      %p104 = scmp.eq.s32.totalorder %s19, 7
      %p105 = por %p103, %p104
      %p106 = scmp.ne.s32.totalorder %s97, %s98
      %p107 = scmp.eq.s32.totalorder %s19, 0
      %p108 = por %p106, %p107
      %p109 = scmp.ne.s32.totalorder %s97, %s98
      %p110 = scmp.eq.s32.totalorder %s20, 7
      %p111 = por %p109, %p110
      %p113 = scmp.ne.s32.totalorder %s98, %s112
      %p114 = scmp.eq.s32.totalorder %s20, 0
      %p115 = por %p113, %p114
      %s117 = sadd.s32 %s116, 1
      %p120 = scmp.eq.s32.totalorder %s14, 7
      %p121 = scmp.ne.s32.totalorder %s116, %s118
      %p122 = scmp.eq.s32.totalorder %s14, 0
      %p123 = por %p121, %p122
      %p124 = scmp.ne.s32.totalorder %s116, %s118
      %p125 = scmp.eq.s32.totalorder %s19, 7
      %p126 = por %p124, %p125
      %p127 = scmp.ne.s32.totalorder %s118, %s119
      %p128 = scmp.eq.s32.totalorder %s19, 0
      %p129 = por %p127, %p128
      %p130 = scmp.ne.s32.totalorder %s118, %s119
      %p131 = scmp.eq.s32.totalorder %s20, 7
      %p132 = por %p130, %p131
      %p134 = scmp.ne.s32.totalorder %s119, %s133
      %p135 = scmp.eq.s32.totalorder %s20, 0
      %p136 = por %p134, %p135
      %s137 = ssub.s32 %s14, %s21
      %p138 = scmp.eq.s32.totalorder %s137, 0
      %s140 = sadd.s32 %s139, 1
      %s141 = scalar_select %p138, %s139, %s140
      %p144 = pneg %p138
      %p145 = scmp.eq.s32.totalorder %s14, 7
      %p146 = por %p144, %p145
      %p147 = scmp.ne.s32.totalorder %s139, %s142
      %p148 = scmp.eq.s32.totalorder %s14, 0
      %p149 = por %p147, %p148
      %p150 = scmp.ne.s32.totalorder %s139, %s142
      %p151 = scmp.eq.s32.totalorder %s19, 7
      %p152 = por %p150, %p151
      %p153 = scmp.ne.s32.totalorder %s142, %s143
      %p154 = scmp.eq.s32.totalorder %s19, 0
      %p155 = por %p153, %p154
      %p156 = scmp.ne.s32.totalorder %s142, %s143
      %p157 = scmp.eq.s32.totalorder %s20, 7
      %p158 = por %p156, %p157
      %p160 = scmp.ne.s32.totalorder %s143, %s159
      %p161 = scmp.eq.s32.totalorder %s20, 0
      %p162 = por %p160, %p161
      %p163 = scmp.le.s32.totalorder 1, %s14
      %p164 = scmp.lt.s32.totalorder %s14, 9
      %p165 = pnand %p163, %p164
      %p166 = pneg %p165
      // Predicated region
      $region9: #{tpu_custom_call.1} parent=5 // pred_check
        _
      $region10: #{tpu_custom_call.1} parent=5 // pred_check_branch
        %168 = sbr.rel (%p165) target = $region12
      $region11: #{tpu_custom_call.1} parent=5 // pred_region
        %s169 = ssub.s32 %s14, 1
        // Predicated region
        $region13: #{tpu_custom_call.1} parent=11 // pred_check
          %p170 = pneg %p87
        $region14: #{tpu_custom_call.1} parent=11 // pred_check_branch
          %172 = sbr.rel (%p170) target = $region16
        $region15: #{tpu_custom_call.1} parent=11 // pred_region
          _
        $region16: #{tpu_custom_call.1} parent=11 // pred_fallthru
          _
        // Predicated region
        $region17: #{tpu_custom_call.1} parent=11 // pred_check
          %p173 = pneg %p108
        $region18: #{tpu_custom_call.1} parent=11 // pred_check_branch
          %175 = sbr.rel (%p173) target = $region20
        $region19: #{tpu_custom_call.1} parent=11 // pred_region
          _
        $region20: #{tpu_custom_call.1} parent=11 // pred_fallthru
          _
        // Predicated region
        $region21: #{tpu_custom_call.1} parent=11 // pred_check
          %p176 = pneg %p129
        $region22: #{tpu_custom_call.1} parent=11 // pred_check_branch
          %178 = sbr.rel (%p176) target = $region24
        $region23: #{tpu_custom_call.1} parent=11 // pred_region
          _
        $region24: #{tpu_custom_call.1} parent=11 // pred_fallthru
          _
      $region12: #{tpu_custom_call.1} parent=5 // pred_fallthru
        _
      %p179 = scmp.lt.s32.totalorder %s14, 8
      // Predicated region
      $region25: #{tpu_custom_call.1} parent=5 // pred_check
        %p180 = pneg %p179
      $region26: #{tpu_custom_call.1} parent=5 // pred_check_branch
        %182 = sbr.rel (%p180) target = $region28
      $region27: #{tpu_custom_call.1} parent=5 // pred_region
        // Predicated region
        $region29: #{tpu_custom_call.1} parent=27 // pred_check
          %p183 = pneg %p34
        $region30: #{tpu_custom_call.1} parent=27 // pred_check_branch
          %185 = sbr.rel (%p183) target = $region32
        $region31: #{tpu_custom_call.1} parent=27 // pred_region
          %s186 = smul.u32 8, %s14
          %p187 = scmp.lt.s32.totalorder %s186, 63
          %s188 = scalar_select %p187, %s186, 63
          %s189 = smul.addr %s188, 8
          %s190 = scalar_lea.vmem %s0, %s189
          %s191 = smul.u32 8, %s14
        $region32: #{tpu_custom_call.1} parent=27 // pred_fallthru
          _
        // Predicated region
        $region33: #{tpu_custom_call.1} parent=27 // pred_check
          %p192 = pneg %p60
        $region34: #{tpu_custom_call.1} parent=27 // pred_check_branch
          %194 = sbr.rel (%p192) target = $region36
        $region35: #{tpu_custom_call.1} parent=27 // pred_region
          %s195 = smul.u32 8, %s14
          %p196 = scmp.lt.s32.totalorder %s195, 63
          %s197 = scalar_select %p196, %s195, 63
          %s198 = smul.addr %s197, 8
          %s199 = scalar_lea.vmem %s1, %s198
          %s200 = smul.u32 8, %s14
        $region36: #{tpu_custom_call.1} parent=27 // pred_fallthru
          _
      $region28: #{tpu_custom_call.1} parent=5 // pred_fallthru
        _
      %p201 = scmp.le.s32.totalorder 1, %s14
      %p202 = scmp.lt.s32.totalorder %s14, 9
      %p203 = pnand %p201, %p202
      %p204 = pneg %p203
      // Predicated region
      $region37: #{tpu_custom_call.1} parent=5 // pred_check
        _
      $region38: #{tpu_custom_call.1} parent=5 // pred_check_branch
        %206 = sbr.rel (%p203) target = $region40
      $region39: #{tpu_custom_call.1} parent=5 // pred_region
        %s207 = ssub.s32 %s14, 1
        %s208 = smul.u32 8, %s19
        %p209 = scmp.lt.s32.totalorder %s208, 63
        %s210 = scalar_select %p209, %s208, 63
        %s211 = smul.addr %s210, 8
        %s212 = scalar_lea.vmem %s0, %s211
        %p213 = pneg %p40
        %p214 = pneg %p37
        %s215 = smul.u32 8, %s19
        %p216 = scmp.lt.s32.totalorder %s215, 63
        %s217 = scalar_select %p216, %s215, 63
        %s218 = smul.addr %s217, 8
        %s219 = scalar_lea.vmem %s1, %s218
        %p220 = pneg %p66
        %p221 = pneg %p63
        %p222 = pneg %p87
        %p223 = pneg %p84
        %p224 = pneg %p108
        %p225 = pneg %p105
        %p226 = pneg %p129
        %p227 = pneg %p126
        %p228 = pneg %p155
        %p229 = pneg %p152
        %s230 = sand.u32 %s142, 1
        %s231 = scalar_lea.sflag [#allocation3], %s230
        %s232 = sand.u32 %s142, 1
        %s233 = smul.addr %s232, 64
        %s234 = scalar_lea.vmem [#allocation2], %s233
        %s235 = smul.u32 8, %s19
        %p236 = scmp.lt.s32.totalorder %s235, 63
        %s237 = scalar_select %p236, %s235, 63
        %s238 = smul.addr %s237, 8
        %s239 = scalar_lea.vmem %s0, %s238
        %s240 = smul.u32 8, %s19
        %s241 = smul.u32 8, %s19
        %p242 = scmp.lt.s32.totalorder %s241, 63
        %s243 = scalar_select %p242, %s241, 63
        %s244 = smul.addr %s243, 8
        %s245 = scalar_lea.vmem %s1, %s244
        %s246 = smul.u32 8, %s19
        %s247 = smul.u32 8, %s19
        %v248 = vld [vmem:[%s239] sm:$0xff]
        %v249 = vld [vmem:[%s239 + $0x8] sm:$0xff]
        %v250 = vld [vmem:[%s239 + $0x10] sm:$0xff]
        %v251 = vld [vmem:[%s239 + $0x18] sm:$0xff]
        %v252 = vld [vmem:[%s239 + $0x20] sm:$0xff]
        %v253 = vld [vmem:[%s239 + $0x28] sm:$0xff]
        %v254 = vld [vmem:[%s239 + $0x30] sm:$0xff]
        %v255 = vld [vmem:[%s239 + $0x38] sm:$0xff]
        %v256 = vld [vmem:[%s245] sm:$0xff]
        %v257 = vld [vmem:[%s245 + $0x8] sm:$0xff]
        %v258 = vld [vmem:[%s245 + $0x10] sm:$0xff]
        %v259 = vld [vmem:[%s245 + $0x18] sm:$0xff]
        %v260 = vld [vmem:[%s245 + $0x20] sm:$0xff]
        %v261 = vld [vmem:[%s245 + $0x28] sm:$0xff]
        %v262 = vld [vmem:[%s245 + $0x30] sm:$0xff]
        %v263 = vld [vmem:[%s245 + $0x38] sm:$0xff]
        %264 = vadd.xlane.f32.xlu0 %v248
        %v265 = vpop.xlane.xlu0 %264
        %266 = vadd.xlane.f32.xlu0 %v249
        %v267 = vpop.xlane.xlu0 %266
        %268 = vadd.xlane.f32.xlu0 %v250
        %v269 = vpop.xlane.xlu0 %268
        %270 = vadd.xlane.f32.xlu0 %v251
        %v271 = vpop.xlane.xlu0 %270
        %272 = vadd.xlane.f32.xlu0 %v252
        %v273 = vpop.xlane.xlu0 %272
        %274 = vadd.xlane.f32.xlu0 %v253
        %v275 = vpop.xlane.xlu0 %274
        %276 = vadd.xlane.f32.xlu0 %v254
        %v277 = vpop.xlane.xlu0 %276
        %278 = vadd.xlane.f32.xlu0 %v255
        %v279 = vpop.xlane.xlu0 %278
        %v280 = vrcp.pop 128.0
        %v281 = vmul.f32 %v265, %v280
        %v282 = vmul.f32 %v267, %v280
        %v283 = vmul.f32 %v269, %v280
        %v284 = vmul.f32 %v271, %v280
        %v285 = vmul.f32 %v273, %v280
        %v286 = vmul.f32 %v275, %v280
        %v287 = vmul.f32 %v277, %v280
        %v288 = vmul.f32 %v279, %v280
        %v289 = vmul.f32 %v248, %v248
        %v290 = vmul.f32 %v249, %v249
        %v291 = vmul.f32 %v250, %v250
        %v292 = vmul.f32 %v251, %v251
        %v293 = vmul.f32 %v252, %v252
        %v294 = vmul.f32 %v253, %v253
        %v295 = vmul.f32 %v254, %v254
        %v296 = vmul.f32 %v255, %v255
        %297 = vadd.xlane.f32.xlu0 %v289
        %v298 = vpop.xlane.xlu0 %297
        %299 = vadd.xlane.f32.xlu0 %v290
        %v300 = vpop.xlane.xlu0 %299
        %301 = vadd.xlane.f32.xlu0 %v291
        %v302 = vpop.xlane.xlu0 %301
        %303 = vadd.xlane.f32.xlu0 %v292
        %v304 = vpop.xlane.xlu0 %303
        %305 = vadd.xlane.f32.xlu0 %v293
        %v306 = vpop.xlane.xlu0 %305
        %307 = vadd.xlane.f32.xlu0 %v294
        %v308 = vpop.xlane.xlu0 %307
        %309 = vadd.xlane.f32.xlu0 %v295
        %v310 = vpop.xlane.xlu0 %309
        %311 = vadd.xlane.f32.xlu0 %v296
        %v312 = vpop.xlane.xlu0 %311
        %v313 = vmul.f32 %v298, %v280
        %v314 = vmul.f32 %v300, %v280
        %v315 = vmul.f32 %v302, %v280
        %v316 = vmul.f32 %v304, %v280
        %v317 = vmul.f32 %v306, %v280
        %v318 = vmul.f32 %v308, %v280
        %v319 = vmul.f32 %v310, %v280
        %v320 = vmul.f32 %v312, %v280
        %v321 = vmul.f32 %v281, %v281
        %v322 = vmul.f32 %v282, %v282
        %v323 = vmul.f32 %v283, %v283
        %v324 = vmul.f32 %v284, %v284
        %v325 = vmul.f32 %v285, %v285
        %v326 = vmul.f32 %v286, %v286
        %v327 = vmul.f32 %v287, %v287
        %v328 = vmul.f32 %v288, %v288
        %v329 = vsub.f32 %v313, %v321
        %v330 = vsub.f32 %v314, %v322
        %v331 = vsub.f32 %v315, %v323
        %v332 = vsub.f32 %v316, %v324
        %v333 = vsub.f32 %v317, %v325
        %v334 = vsub.f32 %v318, %v326
        %v335 = vsub.f32 %v319, %v327
        %v336 = vsub.f32 %v320, %v328
        %v337 = vmax.f32 %v329, 0.0
        %v338 = vmax.f32 %v330, 0.0
        %v339 = vmax.f32 %v331, 0.0
        %v340 = vmax.f32 %v332, 0.0
        %v341 = vmax.f32 %v333, 0.0
        %v342 = vmax.f32 %v334, 0.0
        %v343 = vmax.f32 %v335, 0.0
        %v344 = vmax.f32 %v336, 0.0
        %v345 = vsub.f32 %v248, %v281
        %v346 = vsub.f32 %v249, %v282
        %v347 = vsub.f32 %v250, %v283
        %v348 = vsub.f32 %v251, %v284
        %v349 = vsub.f32 %v252, %v285
        %v350 = vsub.f32 %v253, %v286
        %v351 = vsub.f32 %v254, %v287
        %v352 = vsub.f32 %v255, %v288
        %v353 = vadd.f32 %v337, 1e-05
        %v354 = vadd.f32 %v338, 1e-05
        %v355 = vadd.f32 %v339, 1e-05
        %v356 = vadd.f32 %v340, 1e-05
        %v357 = vadd.f32 %v341, 1e-05
        %v358 = vadd.f32 %v342, 1e-05
        %v359 = vadd.f32 %v343, 1e-05
        %v360 = vadd.f32 %v344, 1e-05
        %v361 = vrsqrt.pop %v353
        %v362 = vrsqrt.pop %v354
        %v363 = vrsqrt.pop %v355
        %v364 = vrsqrt.pop %v356
        %v365 = vrsqrt.pop %v357
        %v366 = vrsqrt.pop %v358
        %v367 = vrsqrt.pop %v359
        %v368 = vrsqrt.pop %v360
        %v369 = vmul.f32 %v345, %v361
        %v370 = vmul.f32 %v346, %v362
        %v371 = vmul.f32 %v347, %v363
        %v372 = vmul.f32 %v348, %v364
        %v373 = vmul.f32 %v349, %v365
        %v374 = vmul.f32 %v350, %v366
        %v375 = vmul.f32 %v351, %v367
        %v376 = vmul.f32 %v352, %v368
        %vm377 = vcmask 523264
        %v378 = vsel %vm377, %v256, 0.0
        %379 = vadd.xlane.f32.xlu0 %v378
        %v380 = vpop.xlane.xlu0 %379
        %v381 = vsel %vm377, %v257, 0.0
        %382 = vadd.xlane.f32.xlu0 %v381
        %v383 = vpop.xlane.xlu0 %382
        %v384 = vsel %vm377, %v258, 0.0
        %385 = vadd.xlane.f32.xlu0 %v384
        %v386 = vpop.xlane.xlu0 %385
        %v387 = vsel %vm377, %v259, 0.0
        %388 = vadd.xlane.f32.xlu0 %v387
        %v389 = vpop.xlane.xlu0 %388
        %v390 = vsel %vm377, %v260, 0.0
        %391 = vadd.xlane.f32.xlu0 %v390
        %v392 = vpop.xlane.xlu0 %391
        %v393 = vsel %vm377, %v261, 0.0
        %394 = vadd.xlane.f32.xlu0 %v393
        %v395 = vpop.xlane.xlu0 %394
        %v396 = vsel %vm377, %v262, 0.0
        %397 = vadd.xlane.f32.xlu0 %v396
        %v398 = vpop.xlane.xlu0 %397
        %v399 = vsel %vm377, %v263, 0.0
        %400 = vadd.xlane.f32.xlu0 %v399
        %v401 = vpop.xlane.xlu0 %400
        %v402 = vrcp.pop 64.0
        %v403 = vmul.f32 %v380, %v402
        %v404 = vmul.f32 %v383, %v402
        %v405 = vmul.f32 %v386, %v402
        %v406 = vmul.f32 %v389, %v402
        %v407 = vmul.f32 %v392, %v402
        %v408 = vmul.f32 %v395, %v402
        %v409 = vmul.f32 %v398, %v402
        %v410 = vmul.f32 %v401, %v402
        %v411 = vmul.f32 %v256, %v256
        %v412 = vmul.f32 %v257, %v257
        %v413 = vmul.f32 %v258, %v258
        %v414 = vmul.f32 %v259, %v259
        %v415 = vmul.f32 %v260, %v260
        %v416 = vmul.f32 %v261, %v261
        %v417 = vmul.f32 %v262, %v262
        %v418 = vmul.f32 %v263, %v263
        %v419 = vsel %vm377, %v411, 0.0
        %420 = vadd.xlane.f32.xlu0 %v419
        %v421 = vpop.xlane.xlu0 %420
        %v422 = vsel %vm377, %v412, 0.0
        %423 = vadd.xlane.f32.xlu0 %v422
        %v424 = vpop.xlane.xlu0 %423
        %v425 = vsel %vm377, %v413, 0.0
        %426 = vadd.xlane.f32.xlu0 %v425
        %v427 = vpop.xlane.xlu0 %426
        %v428 = vsel %vm377, %v414, 0.0
        %429 = vadd.xlane.f32.xlu0 %v428
        %v430 = vpop.xlane.xlu0 %429
        %v431 = vsel %vm377, %v415, 0.0
        %432 = vadd.xlane.f32.xlu0 %v431
        %v433 = vpop.xlane.xlu0 %432
        %v434 = vsel %vm377, %v416, 0.0
        %435 = vadd.xlane.f32.xlu0 %v434
        %v436 = vpop.xlane.xlu0 %435
        %v437 = vsel %vm377, %v417, 0.0
        %438 = vadd.xlane.f32.xlu0 %v437
        %v439 = vpop.xlane.xlu0 %438
        %v440 = vsel %vm377, %v418, 0.0
        %441 = vadd.xlane.f32.xlu0 %v440
        %v442 = vpop.xlane.xlu0 %441
        %v443 = vmul.f32 %v421, %v402
        %v444 = vmul.f32 %v424, %v402
        %v445 = vmul.f32 %v427, %v402
        %v446 = vmul.f32 %v430, %v402
        %v447 = vmul.f32 %v433, %v402
        %v448 = vmul.f32 %v436, %v402
        %v449 = vmul.f32 %v439, %v402
        %v450 = vmul.f32 %v442, %v402
        %v451 = vmul.f32 %v403, %v403
        %v452 = vmul.f32 %v404, %v404
        %v453 = vmul.f32 %v405, %v405
        %v454 = vmul.f32 %v406, %v406
        %v455 = vmul.f32 %v407, %v407
        %v456 = vmul.f32 %v408, %v408
        %v457 = vmul.f32 %v409, %v409
        %v458 = vmul.f32 %v410, %v410
        %v459 = vsub.f32 %v443, %v451
        %v460 = vsub.f32 %v444, %v452
        %v461 = vsub.f32 %v445, %v453
        %v462 = vsub.f32 %v446, %v454
        %v463 = vsub.f32 %v447, %v455
        %v464 = vsub.f32 %v448, %v456
        %v465 = vsub.f32 %v449, %v457
        %v466 = vsub.f32 %v450, %v458
        %v467 = vmax.f32 %v459, 0.0
        %v468 = vmax.f32 %v460, 0.0
        %v469 = vmax.f32 %v461, 0.0
        %v470 = vmax.f32 %v462, 0.0
        %v471 = vmax.f32 %v463, 0.0
        %v472 = vmax.f32 %v464, 0.0
        %v473 = vmax.f32 %v465, 0.0
        %v474 = vmax.f32 %v466, 0.0
        %v475 = vsub.f32 %v256, %v403
        %v476 = vsub.f32 %v257, %v404
        %v477 = vsub.f32 %v258, %v405
        %v478 = vsub.f32 %v259, %v406
        %v479 = vsub.f32 %v260, %v407
        %v480 = vsub.f32 %v261, %v408
        %v481 = vsub.f32 %v262, %v409
        %v482 = vsub.f32 %v263, %v410
        %v483 = vadd.f32 %v467, 1e-05
        %v484 = vadd.f32 %v468, 1e-05
        %v485 = vadd.f32 %v469, 1e-05
        %v486 = vadd.f32 %v470, 1e-05
        %v487 = vadd.f32 %v471, 1e-05
        %v488 = vadd.f32 %v472, 1e-05
        %v489 = vadd.f32 %v473, 1e-05
        %v490 = vadd.f32 %v474, 1e-05
        %v491 = vrsqrt.pop %v483
        %v492 = vrsqrt.pop %v484
        %v493 = vrsqrt.pop %v485
        %v494 = vrsqrt.pop %v486
        %v495 = vrsqrt.pop %v487
        %v496 = vrsqrt.pop %v488
        %v497 = vrsqrt.pop %v489
        %v498 = vrsqrt.pop %v490
        %v499 = vmul.f32 %v475, %v491
        %v500 = vmul.f32 %v476, %v492
        %v501 = vmul.f32 %v477, %v493
        %v502 = vmul.f32 %v478, %v494
        %v503 = vmul.f32 %v479, %v495
        %v504 = vmul.f32 %v480, %v496
        %v505 = vmul.f32 %v481, %v497
        %v506 = vmul.f32 %v482, %v498
        %v507 = vld [vmem:[%s2] sm:$0xff]
        %v508 = vld [vmem:[%s2 + $0x8] sm:$0xff]
        %v509 = vld [vmem:[%s2 + $0x10] sm:$0xff]
        %v510 = vld [vmem:[%s2 + $0x18] sm:$0xff]
        %v511 = vld [vmem:[%s2 + $0x20] sm:$0xff]
        %v512 = vld [vmem:[%s2 + $0x28] sm:$0xff]
        %v513 = vld [vmem:[%s2 + $0x30] sm:$0xff]
        %v514 = vld [vmem:[%s2 + $0x38] sm:$0xff]
        %v515 = vld [vmem:[%s2 + $0x40] sm:$0xff]
        %v516 = vld [vmem:[%s2 + $0x48] sm:$0xff]
        %v517 = vld [vmem:[%s2 + $0x50] sm:$0xff]
        %v518 = vld [vmem:[%s2 + $0x58] sm:$0xff]
        %v519 = vld [vmem:[%s2 + $0x60] sm:$0xff]
        %v520 = vld [vmem:[%s2 + $0x68] sm:$0xff]
        %v521 = vld [vmem:[%s2 + $0x70] sm:$0xff]
        %v522 = vld [vmem:[%s2 + $0x78] sm:$0xff]
        %v523 = vld [vmem:[%s3] sm:$0xff]
        %v524 = vld [vmem:[%s3 + $0x8] sm:$0xff]
        %v525 = vld [vmem:[%s3 + $0x10] sm:$0xff]
        %v526 = vld [vmem:[%s3 + $0x18] sm:$0xff]
        %v527 = vld [vmem:[%s3 + $0x20] sm:$0xff]
        %v528 = vld [vmem:[%s3 + $0x28] sm:$0xff]
        %v529 = vld [vmem:[%s3 + $0x30] sm:$0xff]
        %v530 = vld [vmem:[%s3 + $0x38] sm:$0xff]
        %v532 = vsel %vm377, %v499, 0
        %v535 = vsel %vm377, %v500, 0
        %v538 = vsel %vm377, %v501, 0
        %v541 = vsel %vm377, %v502, 0
        %v544 = vsel %vm377, %v503, 0
        %v547 = vsel %vm377, %v504, 0
        %v550 = vsel %vm377, %v505, 0
        %v553 = vsel %vm377, %v506, 0
        %555 = vmatprep.subr.mxu0 0.0
        %556 = vmatpush1.msra.mxu0 %v523
        %557 = vmatprep.subr.mxu0 0.0
        %558 = vmatpush1.msra.mxu0 %v524
        %559 = vmatprep.subr.mxu0 0.0
        %560 = vmatpush1.msra.mxu0 %v525
        %561 = vmatprep.subr.mxu0 0.0
        %562 = vmatpush1.msra.mxu0 %v526
        %563 = vmatprep.subr.mxu0 0.0
        %564 = vmatpush1.msra.mxu0 %v527
        %565 = vmatprep.subr.mxu0 0.0
        %566 = vmatpush1.msra.mxu0 %v528
        %567 = vmatprep.subr.mxu0 0.0
        %568 = vmatpush1.msra.mxu0 %v529
        %569 = vmatprep.subr.mxu0 0.0
        %570 = vmatpush1.msra.mxu0 %v530
        %571 = vmatprep.subr.mxu0 0.0
        %572 = vmatpush1.msra.mxu0 0.0
        %573 = vmatprep.subr.mxu0 0.0
        %574 = vmatpush1.msra.mxu0 0.0
        %575 = vmatprep.subr.mxu0 0.0
        %576 = vmatpush1.msra.mxu0 0.0
        %577 = vmatprep.subr.mxu0 0.0
        %578 = vmatpush1.msra.mxu0 0.0
        %579 = vmatprep.subr.mxu0 0.0
        %580 = vmatpush1.msra.mxu0 0.0
        %581 = vmatprep.subr.mxu0 0.0
        %582 = vmatpush1.msra.mxu0 0.0
        %583 = vmatprep.subr.mxu0 0.0
        %584 = vmatpush1.msra.mxu0 0.0
        %585 = vmatprep.subr.mxu0 0.0
        %586 = vmatpush1.msra.mxu0 0.0
        %587 = vmatprep.subr.mxu0 0.0
        %588 = vmatpush1.msra.mxu0 0.0
        %589 = vmatprep.subr.mxu0 0.0
        %590 = vmatpush1.msra.mxu0 0.0
        %591 = vmatprep.subr.mxu0 0.0
        %592 = vmatpush1.msra.mxu0 0.0
        %593 = vmatprep.subr.mxu0 0.0
        %594 = vmatpush1.msra.mxu0 0.0
        %595 = vmatprep.subr.mxu0 0.0
        %596 = vmatpush1.msra.mxu0 0.0
        %597 = vmatprep.subr.mxu0 0.0
        %598 = vmatpush1.msra.mxu0 0.0
        %599 = vmatprep.subr.mxu0 0.0
        %600 = vmatpush1.msra.mxu0 0.0
        %601 = vmatprep.subr.mxu0 0.0
        %602 = vmatpush1.msra.mxu0 0.0
        %603 = vmatprep.subr.mxu0 0.0
        %604 = vmatpush1.msra.mxu0 0.0
        %605 = vmatprep.subr.mxu0 0.0
        %606 = vmatpush1.msra.mxu0 0.0
        %607 = vmatprep.subr.mxu0 0.0
        %608 = vmatpush1.msra.mxu0 0.0
        %609 = vmatprep.subr.mxu0 0.0
        %610 = vmatpush1.msra.mxu0 0.0
        %611 = vmatprep.subr.mxu0 0.0
        %612 = vmatpush1.msra.mxu0 0.0
        %613 = vmatprep.subr.mxu0 0.0
        %614 = vmatpush1.msra.mxu0 0.0
        %615 = vmatprep.subr.mxu0 0.0
        %616 = vmatpush1.msra.mxu0 0.0
        %617 = vmatprep.subr.mxu0 0.0
        %618 = vmatpush1.msra.mxu0 0.0
        %619 = vmatprep.mubr.f32.mxu0 0.0
        %620 = vmatmul.mubr.f32.gmra.mrb[0].mxu0 %v532
        %v621 = vpop.f32.mrb[0].mxu0
        %v622 = vadd.f32 0.0, %v621
        %v623 = vpop.f32.mrb[0].mxu0
        %624 = vmatprep.mubr.f32.mxu0 0.0
        %625 = vmatmul.mubr.f32.gmra.mrb[0].mxu0 %v535
        %v626 = vpop.f32.mrb[0].mxu0
        %v627 = vadd.f32 0.0, %v626
        %v628 = vpop.f32.mrb[0].mxu0
        %629 = vmatprep.mubr.f32.mxu0 0.0
        %630 = vmatmul.mubr.f32.gmra.mrb[0].mxu0 %v538
        %v631 = vpop.f32.mrb[0].mxu0
        %v632 = vadd.f32 0.0, %v631
        %v633 = vpop.f32.mrb[0].mxu0
        %634 = vmatprep.mubr.f32.mxu0 0.0
        %635 = vmatmul.mubr.f32.gmra.mrb[0].mxu0 %v541
        %v636 = vpop.f32.mrb[0].mxu0
        %v637 = vadd.f32 0.0, %v636
        %v638 = vpop.f32.mrb[0].mxu0
        %639 = vmatprep.mubr.f32.mxu0 0.0
        %640 = vmatmul.mubr.f32.gmra.mrb[0].mxu0 %v544
        %v641 = vpop.f32.mrb[0].mxu0
        %v642 = vadd.f32 0.0, %v641
        %v643 = vpop.f32.mrb[0].mxu0
        %644 = vmatprep.mubr.f32.mxu0 0.0
        %645 = vmatmul.mubr.f32.gmra.mrb[0].mxu0 %v547
        %v646 = vpop.f32.mrb[0].mxu0
        %v647 = vadd.f32 0.0, %v646
        %v648 = vpop.f32.mrb[0].mxu0
        %649 = vmatprep.mubr.f32.mxu0 0.0
        %650 = vmatmul.mubr.f32.gmra.mrb[0].mxu0 %v550
        %v651 = vpop.f32.mrb[0].mxu0
        %v652 = vadd.f32 0.0, %v651
        %v653 = vpop.f32.mrb[0].mxu0
        %654 = vmatprep.mubr.f32.mxu0 0.0
        %655 = vmatmul.mubr.f32.gmra.mrb[0].mxu0 %v553
        %v656 = vpop.f32.mrb[0].mxu0
        %v657 = vadd.f32 0.0, %v656
        %v658 = vpop.f32.mrb[0].mxu0
        %659 = vdwg.mxu0
        %660 = vmatprep.subr.mxu0 0.0
        %661 = vmatpush1.msra.mxu0 %v507
        %662 = vmatprep.subr.mxu0 0.0
        %663 = vmatpush1.msra.mxu0 %v508
        %664 = vmatprep.subr.mxu0 0.0
        %665 = vmatpush1.msra.mxu0 %v509
        %666 = vmatprep.subr.mxu0 0.0
        %667 = vmatpush1.msra.mxu0 %v510
        %668 = vmatprep.subr.mxu0 0.0
        %669 = vmatpush1.msra.mxu0 %v511
        %670 = vmatprep.subr.mxu0 0.0
        %671 = vmatpush1.msra.mxu0 %v512
        %672 = vmatprep.subr.mxu0 0.0
        %673 = vmatpush1.msra.mxu0 %v513
        %674 = vmatprep.subr.mxu0 0.0
        %675 = vmatpush1.msra.mxu0 %v514
        %676 = vmatprep.subr.mxu0 0.0
        %677 = vmatpush1.msra.mxu0 %v515
        %678 = vmatprep.subr.mxu0 0.0
        %679 = vmatpush1.msra.mxu0 %v516
        %680 = vmatprep.subr.mxu0 0.0
        %681 = vmatpush1.msra.mxu0 %v517
        %682 = vmatprep.subr.mxu0 0.0
        %683 = vmatpush1.msra.mxu0 %v518
        %684 = vmatprep.subr.mxu0 0.0
        %685 = vmatpush1.msra.mxu0 %v519
        %686 = vmatprep.subr.mxu0 0.0
        %687 = vmatpush1.msra.mxu0 %v520
        %688 = vmatprep.subr.mxu0 0.0
        %689 = vmatpush1.msra.mxu0 %v521
        %690 = vmatprep.subr.mxu0 0.0
        %691 = vmatpush1.msra.mxu0 %v522
        %692 = vmatprep.subr.mxu0 0.0
        %693 = vmatpush1.msra.mxu0 0.0
        %694 = vmatprep.subr.mxu0 0.0
        %695 = vmatpush1.msra.mxu0 0.0
        %696 = vmatprep.subr.mxu0 0.0
        %697 = vmatpush1.msra.mxu0 0.0
        %698 = vmatprep.subr.mxu0 0.0
        %699 = vmatpush1.msra.mxu0 0.0
        %700 = vmatprep.subr.mxu0 0.0
        %701 = vmatpush1.msra.mxu0 0.0
        %702 = vmatprep.subr.mxu0 0.0
        %703 = vmatpush1.msra.mxu0 0.0
        %704 = vmatprep.subr.mxu0 0.0
        %705 = vmatpush1.msra.mxu0 0.0
        %706 = vmatprep.subr.mxu0 0.0
        %707 = vmatpush1.msra.mxu0 0.0
        %708 = vmatprep.subr.mxu0 0.0
        %709 = vmatpush1.msra.mxu0 0.0
        %710 = vmatprep.subr.mxu0 0.0
        %711 = vmatpush1.msra.mxu0 0.0
        %712 = vmatprep.subr.mxu0 0.0
        %713 = vmatpush1.msra.mxu0 0.0
        %714 = vmatprep.subr.mxu0 0.0
        %715 = vmatpush1.msra.mxu0 0.0
        %716 = vmatprep.subr.mxu0 0.0
        %717 = vmatpush1.msra.mxu0 0.0
        %718 = vmatprep.subr.mxu0 0.0
        %719 = vmatpush1.msra.mxu0 0.0
        %720 = vmatprep.subr.mxu0 0.0
        %721 = vmatpush1.msra.mxu0 0.0
        %722 = vmatprep.subr.mxu0 0.0
        %723 = vmatpush1.msra.mxu0 0.0
        %724 = vmatprep.mubr.f32.mxu0 0.0
        %725 = vmatmul.mubr.f32.gmra.mrb[0].mxu0 %v369
        %v726 = vpop.f32.mrb[0].mxu0
        %v727 = vadd.f32 %v622, %v726
        %v728 = vpop.f32.mrb[0].mxu0
        %729 = vmatprep.mubr.f32.mxu0 0.0
        %730 = vmatmul.mubr.f32.gmra.mrb[0].mxu0 %v370
        %v731 = vpop.f32.mrb[0].mxu0
        %v732 = vadd.f32 %v627, %v731
        %v733 = vpop.f32.mrb[0].mxu0
        %734 = vmatprep.mubr.f32.mxu0 0.0
        %735 = vmatmul.mubr.f32.gmra.mrb[0].mxu0 %v371
        %v736 = vpop.f32.mrb[0].mxu0
        %v737 = vadd.f32 %v632, %v736
        %v738 = vpop.f32.mrb[0].mxu0
        %739 = vmatprep.mubr.f32.mxu0 0.0
        %740 = vmatmul.mubr.f32.gmra.mrb[0].mxu0 %v372
        %v741 = vpop.f32.mrb[0].mxu0
        %v742 = vadd.f32 %v637, %v741
        %v743 = vpop.f32.mrb[0].mxu0
        %744 = vmatprep.mubr.f32.mxu0 0.0
        %745 = vmatmul.mubr.f32.gmra.mrb[0].mxu0 %v373
        %v746 = vpop.f32.mrb[0].mxu0
        %v747 = vadd.f32 %v642, %v746
        %v748 = vpop.f32.mrb[0].mxu0
        %749 = vmatprep.mubr.f32.mxu0 0.0
        %750 = vmatmul.mubr.f32.gmra.mrb[0].mxu0 %v374
        %v751 = vpop.f32.mrb[0].mxu0
        %v752 = vadd.f32 %v647, %v751
        %v753 = vpop.f32.mrb[0].mxu0
        %754 = vmatprep.mubr.f32.mxu0 0.0
        %755 = vmatmul.mubr.f32.gmra.mrb[0].mxu0 %v375
        %v756 = vpop.f32.mrb[0].mxu0
        %v757 = vadd.f32 %v652, %v756
        %v758 = vpop.f32.mrb[0].mxu0
        %759 = vmatprep.mubr.f32.mxu0 0.0
        %760 = vmatmul.mubr.f32.gmra.mrb[0].mxu0 %v376
        %v761 = vpop.f32.mrb[0].mxu0
        %v762 = vadd.f32 %v657, %v761
        %v763 = vpop.f32.mrb[0].mxu0
        %764 = vdwg.mxu0
        %v765 = vld [vmem:[%s4] sm:$0x1]
        %v767 = vlaneseq
        %v768 = vshrl.u32 %v767, 7
        %v769 = vsub.s32 0, %v768
        %v770 = vrot.slane %v765, %v769
        %v772 = vadd.f32 %v727, %v770
        %v773 = vadd.f32 %v732, %v770
        %v774 = vadd.f32 %v737, %v770
        %v775 = vadd.f32 %v742, %v770
        %v776 = vadd.f32 %v747, %v770
        %v777 = vadd.f32 %v752, %v770
        %v778 = vadd.f32 %v757, %v770
        %v779 = vadd.f32 %v762, %v770
        %780 = vst [vmem:[%s234] sm:$0xff] %v772
        %781 = vst [vmem:[%s234 + $0x8] sm:$0xff] %v773
        %782 = vst [vmem:[%s234 + $0x10] sm:$0xff] %v774
        %783 = vst [vmem:[%s234 + $0x18] sm:$0xff] %v775
        %784 = vst [vmem:[%s234 + $0x20] sm:$0xff] %v776
        %785 = vst [vmem:[%s234 + $0x28] sm:$0xff] %v777
        %786 = vst [vmem:[%s234 + $0x30] sm:$0xff] %v778
        %787 = vst [vmem:[%s234 + $0x38] sm:$0xff] %v779
        %s788 = sand.u32 %s142, 1
        %s789 = scalar_lea.sflag [#allocation3], %s788
        %s790 = sand.u32 %s142, 1
        %s791 = smul.addr %s790, 64
        %s792 = scalar_lea.vmem [#allocation2], %s791
        // Predicated region
        $region41: #{tpu_custom_call.1} parent=39 // pred_check
          %p793 = pneg %p152
        $region42: #{tpu_custom_call.1} parent=39 // pred_check_branch
          %795 = sbr.rel (%p793) target = $region44
        $region43: #{tpu_custom_call.1} parent=39 // pred_region
          %s796 = smul.u32 8, %s19
          %s798 = ssub.s32 1024, 1024
          %799 = vsyncadd %s789, %s798
          %s800 = smul.addr %s796, 128
          %s801 = scalar_lea.hbm %s5, %s800
          %s802 = sshll.u32 %s792, 4
          %s803 = int_to_ptr.vmem [resolvable:$true] %s802
          %808 = dma.vmem_to_hbm [thread:$0]  %s803, 1024, %s801, %s789, 128, 128, 8
        $region44: #{tpu_custom_call.1} parent=39 // pred_fallthru
          _
      $region40: #{tpu_custom_call.1} parent=5 // pred_fallthru
        _
      %p809 = scmp.le.s32.totalorder 2, %s14
      // Predicated region
      $region45: #{tpu_custom_call.1} parent=5 // pred_check
        %p810 = pneg %p809
      $region46: #{tpu_custom_call.1} parent=5 // pred_check_branch
        %812 = sbr.rel (%p810) target = $region48
      $region47: #{tpu_custom_call.1} parent=5 // pred_region
        %s813 = ssub.s32 %s14, 2
        // Predicated region
        $region49: #{tpu_custom_call.1} parent=47 // pred_check
          %p814 = pneg %p158
        $region50: #{tpu_custom_call.1} parent=47 // pred_check_branch
          %816 = sbr.rel (%p814) target = $region52
        $region51: #{tpu_custom_call.1} parent=47 // pred_region
          %s817 = sand.u32 %s143, 1
          %s818 = scalar_lea.sflag [#allocation3], %s817
          %s819 = sand.u32 %s143, 1
          %s820 = smul.addr %s819, 64
          %s821 = scalar_lea.vmem [#allocation2], %s820
          %822 = dma.done %s818, 1024
        $region52: #{tpu_custom_call.1} parent=47 // pred_fallthru
          _
      $region48: #{tpu_custom_call.1} parent=5 // pred_fallthru
        _
    $region6: #{tpu_custom_call.1} parent=1 // loop_footer
      %s18 = sadd.s32 1, %s14
    $region7: #{tpu_custom_call.1} parent=1 // loop_footer_branch
      %13 = sbr.rel target = $region3
    $region8: #{tpu_custom_call.1} parent=1 // loop_exit
      _
    %823 = vsyncpa [#allocation3], 1
    %s824 = scalar_lea.sflag [#allocation3], 1
    %825 = vsyncpa %s824, 1

</llo_original>
